<compile_context>
chip_gen: v6e
topology: v6e:2x2x1
jax: 0.10.0
libtpu: 0.0.40
codegen_flags: <defaults>
</compile_context>

<pallas_src>
from collections import OrderedDict

import jax
import jax.numpy as jnp
from jax import lax
from jax.experimental import pallas as pl
from jax.experimental.pallas import tpu as pltpu


# ----------------------------------------------------------------------------
# Fused Pallas kernel: in-kernel im2col + conv(3x3, pad=1) + bias + ReLU
#                      + flatten + linear, for a block of NB images.
# ----------------------------------------------------------------------------
def _make_fused_kernel(NB, Cin, H, W, Cout, hidden):
    HW = H * W
    PAD = W + 1  # max |flattened tap shift| = W + 1

    def kernel(x_ref, wc_ref, cb_ref, wfc_ref, fb_ref, o_ref):
        # x_ref  : (NB, Cin, HW)       raw images, spatial flattened (h*W + w)
        # wc_ref : (Cout, 9*Cin)       conv weight, columns ordered (kh, kw, c)
        # cb_ref : (Cout, 1)           conv bias
        # wfc_ref: (HW, Cout*hidden)   lane-dense FC weight (block-diagonal form)
        # fb_ref : (1, hidden)         FC bias
        # o_ref  : (NB, hidden)
        col = lax.broadcasted_iota(jnp.int32, (Cin, HW), 1) % W
        mask_l = col >= 1            # tap dx = -1 : w-1 must be >= 0
        mask_r = col < (W - 1)       # tap dx = +1 : w+1 must be <  W

        # ---- conv + bias + ReLU, one image at a time (NB is small/static) ----
        act_rows = []
        for j in range(NB):
            xi = x_ref[j]                                       # (Cin, HW)
            zp = jnp.zeros((Cin, PAD), jnp.float32)
            xf = jnp.concatenate([zp, xi, zp], axis=1)          # (Cin, HW + 2*PAD)
            taps = []
            for kh in range(3):
                for kw in range(3):
                    s = (kh - 1) * W + (kw - 1)
                    # shifted plane: value at pixel i comes from pixel i+s
                    # (zero-filled outside the image); vertical out-of-bounds
                    # is handled by the zero pad, horizontal by the masks.
                    t = xf[:, PAD + s: PAD + s + HW]            # (Cin, HW)
                    if kw == 0:
                        t = jnp.where(mask_l, t, 0.0)
                    elif kw == 2:
                        t = jnp.where(mask_r, t, 0.0)
                    taps.append(t)
            patches = jnp.concatenate(taps, axis=0)             # (9*Cin, HW), tap-major
            acc = jnp.dot(wc_ref[...], patches,
                          preferred_element_type=jnp.float32)   # (Cout, HW), lane-dense
            act_rows.append(jnp.maximum(acc + cb_ref[...], 0.0))

        # ---- FC as ONE MXU matmul over the whole image block ----
        # rows are (image j, channel c); columns of the result are (c', d).
        act = jnp.concatenate(act_rows, axis=0)                 # (NB*Cout, HW)
        big = jnp.dot(act, wfc_ref[...],
                      preferred_element_type=jnp.float32)       # (NB*Cout, Cout*hidden)

        # y_j[d] = fc_b[d] + sum_c big[j*Cout + c, c*hidden + d]
        # (static diagonal-block extraction; tiny VPU adds, no matmul chain)
        outs = []
        for j in range(NB):
            y = fb_ref[...]                                     # (1, hidden)
            for c in range(Cout):
                r = j * Cout + c
                y = y + big[r:r + 1, c * hidden:(c + 1) * hidden]
            outs.append(y)
        o_ref[...] = jnp.concatenate(outs, axis=0).astype(o_ref.dtype)

    return kernel


def fused_dag_forward(x_nchw, prepped, *, block_images=None):
    """conv -> relu -> flatten -> fc for the whole batch in one pallas_call."""
    N, Cin, H, W = x_nchw.shape
    HW = H * W
    wc, cb, wfc, fb = prepped['wc'], prepped['cb'], prepped['wfc'], prepped['fb']
    Cout = wc.shape[0]
    hidden = fb.shape[-1]
    NB = block_images if block_images is not None else min(N, 8)
    assert N % NB == 0, "batch must be divisible by the image block size"
    n_blocks = N // NB

    kernel = _make_fused_kernel(NB, Cin, H, W, Cout, hidden)
    # Contiguous row-major reshape (metadata only): (N, Cin, H, W) -> (N, Cin, H*W)
    x3 = x_nchw.reshape(N, Cin, HW).astype(jnp.float32)

    out = pl.pallas_call(
        kernel,
        out_shape=jax.ShapeDtypeStruct((N, hidden), jnp.float32),
        grid=(n_blocks,),
        in_specs=[
            pl.BlockSpec((NB, Cin, HW), lambda i: (i, 0, 0)),       # image block
            pl.BlockSpec((Cout, 9 * Cin), lambda i: (0, 0)),        # conv weight (resident)
            pl.BlockSpec((Cout, 1), lambda i: (0, 0)),              # conv bias
            pl.BlockSpec((HW, Cout * hidden), lambda i: (0, 0)),    # FC weight (resident, lane-dense)
            pl.BlockSpec((1, hidden), lambda i: (0, 0)),            # FC bias
        ],
        out_specs=pl.BlockSpec((NB, hidden), lambda i: (i, 0)),
        compiler_params=pltpu.CompilerParams(
            # Single tiny step: don't split across TensorCores (v7x); flip to
            # "parallel" only once there are several image blocks per call.
            dimension_semantics=("arbitrary",) if n_blocks < 4 else ("parallel",)),
    )(x3, wc, cb, wfc, fb)
    return out


def prepare_params(conv_w, conv_b, fc_w, fc_b, H, W):
    """One-time host-side weight re-layout.

    * conv weight columns are ordered (kh, kw, c) to match the in-kernel tap
      concatenation order (tap-major, channel-minor).
    * FC weight is folded into the lane-dense block-diagonal layout
      (HW, Cout*hidden):  wfc[h, c*hidden + d] = fc_w[d, c*HW + h],
      absorbing the PyTorch NCHW flatten ordering and the runtime fc_w.T.
    """
    Cout, Cin, KH, KW = conv_w.shape
    assert (KH, KW) == (3, 3), "kernel instantiation assumes a 3x3 conv, pad=1"
    hidden, fc_in = fc_w.shape
    HW = H * W
    assert fc_in == Cout * HW
    wc = conv_w.transpose(0, 2, 3, 1).reshape(Cout, KH * KW * Cin).astype(jnp.float32)
    cb = conv_b.reshape(Cout, 1).astype(jnp.float32)
    wfc = (fc_w.reshape(hidden, Cout, HW)
           .transpose(2, 1, 0)
           .reshape(HW, Cout * hidden)
           .astype(jnp.float32))
    fb = fc_b.reshape(1, hidden).astype(jnp.float32)
    return {'wc': wc, 'cb': cb, 'wfc': wfc, 'fb': fb}


# ----------------------------------------------------------------------------
# DAG executor mirroring the PyTorch SpikeDAGModule semantics
# ----------------------------------------------------------------------------
# TODO(synk): the generic DAG orchestration (arbitrary nodes/ops, topological
# execution) is host-side Python control flow, not a TPU kernel; only the
# concrete conv->relu->flatten->fc op is lowered to Pallas.
class SpikeDAGModule:
    def __init__(self):
        self.nodes = OrderedDict()
        self.ops = OrderedDict()
        self.inputs_nodes = []
        self.outputs_nodes = []

    def add_node(self, name, tensor=None):
        assert name not in self.nodes, f'Error: node {name} already in dag.nodes'
        self.nodes[name] = tensor

    def add_op(self, name, op, in_nodes, out_nodes):
        assert name not in self.ops, f'Error: op {name} already in dag.ops'
        assert len(in_nodes) and len(out_nodes)
        self.ops[name] = {'op': op, 'in_nodes': in_nodes, 'out_nodes': out_nodes}
        print(f'add node {name}: {in_nodes}->{out_nodes}')

    def clear_nodes(self):
        for key in self.nodes:
            self.nodes[key] = None

    def find_end_nodes(self):
        in_nodes = []
        for _, op in self.ops.items():
            in_nodes.extend(op['in_nodes'])
        return [node for node in self.nodes if node not in in_nodes]

    def do_operation(self, op_name):
        op = self.ops[op_name]
        op_inputs = tuple(self.nodes[_] for _ in op['in_nodes'])
        op_outputs = op['op'](*op_inputs)
        if isinstance(op_outputs, jnp.ndarray):
            op_outputs = [op_outputs]
        for node_name, op_output in zip(op['out_nodes'], op_outputs):
            self.nodes[node_name] = op_output

    def forward(self, *inputs):
        assert len(self.inputs_nodes) == len(inputs)
        assert len(self.outputs_nodes)
        for inp, name in zip(inputs, self.inputs_nodes):
            self.nodes[name] = inp
        for op_name in self.ops:
            self.do_operation(op_name)
        outputs = [self.nodes[_] for _ in self.outputs_nodes]
        return outputs if len(outputs) > 1 else outputs[0]

    __call__ = forward


def build_dag(prepped):
    """Register the fused conv+relu+flatten+fc hot path as a single DAG op."""
    dag = SpikeDAGModule()
    dag.add_node('dag_input_0')
    dag.add_node('fc_0_out_0')

    fused = jax.jit(fused_dag_forward)
    dag.add_op('fused_conv_relu_flatten_fc_0',
               lambda x: fused(x, prepped),
               in_nodes=('dag_input_0',), out_nodes=('fc_0_out_0',))

    dag.inputs_nodes = ['dag_input_0']
    dag.outputs_nodes = ['fc_0_out_0']
    return dag


# ----------------------------------------------------------------------------
# Pure-jnp reference matching PyTorch NCHW semantics
# ----------------------------------------------------------------------------
def reference_forward(x, params):
    y = jax.lax.conv_general_dilated(
        x, params['conv_w'], window_strides=(1, 1), padding=((1, 1), (1, 1)),
        dimension_numbers=('NCHW', 'OIHW', 'NCHW'))
    y = y + params['conv_b'][None, :, None, None]
    y = jnp.maximum(y, 0.0)
    y = y.reshape(y.shape[0], -1)
    y = y @ params['fc_w'].T + params['fc_b']
    return y


if __name__ == "__main__":
    key = jax.random.PRNGKey(0)
    k_x, k_cw, k_cb, k_fw, k_fb = jax.random.split(key, 5)

    N, Cin, H, W = 2, 4, 16, 16
    Cout = 8
    hidden = 32
    fc_in = Cout * H * W  # 2048

    x = jax.random.normal(k_x, (N, Cin, H, W), dtype=jnp.float32)

    params = {
        'conv_w': 0.1 * jax.random.normal(k_cw, (Cout, Cin, 3, 3), dtype=jnp.float32),
        'conv_b': 0.1 * jax.random.normal(k_cb, (Cout,), dtype=jnp.float32),
        'fc_w': 0.05 * jax.random.normal(k_fw, (hidden, fc_in), dtype=jnp.float32),
        'fc_b': 0.05 * jax.random.normal(k_fb, (hidden,), dtype=jnp.float32),
    }

    prepped = prepare_params(params['conv_w'], params['conv_b'],
                             params['fc_w'], params['fc_b'], H, W)

    dag = build_dag(prepped)
    out = jax.block_until_ready(dag(x))

    ref = jax.block_until_ready(reference_forward(x, params))
    assert out.shape == (N, hidden), out.shape
    assert jnp.allclose(out, ref, atol=1e-4, rtol=1e-4), "mismatch vs reference"

    print("KERNEL_OK")
</pallas_src>

<mosaic_0001>
module attributes {stable_mosaic.version = 11 : i64} {
  func.func @kernel(%arg0: i32, %arg1: memref<2x4x256xf32, #tpu.memory_space<vmem>>, %arg2: memref<8x36xf32, #tpu.memory_space<vmem>>, %arg3: memref<8x1xf32, #tpu.memory_space<vmem>>, %arg4: memref<256x256xf32, #tpu.memory_space<vmem>>, %arg5: memref<1x32xf32, #tpu.memory_space<vmem>>, %arg6: memref<2x32xf32, #tpu.memory_space<vmem>>) attributes {dimension_semantics = [#tpu.dimension_semantics<arbitrary>], iteration_bounds = array<i64: 1>, scalar_prefetch = 0 : i64, scratch_operands = 0 : i64, tpu.core_type = #tpu.core_type<tc>, window_params = [{transform_indices = @transform_0, window_bounds = array<i64: 2, 4, 256>}, {pipeline_mode = #tpu.pipeline_mode<synchronous>, transform_indices = @transform_1, window_bounds = array<i64: 8, 36>}, {pipeline_mode = #tpu.pipeline_mode<synchronous>, transform_indices = @transform_2, window_bounds = array<i64: 8, 1>}, {pipeline_mode = #tpu.pipeline_mode<synchronous>, transform_indices = @transform_3, window_bounds = array<i64: 256, 256>}, {pipeline_mode = #tpu.pipeline_mode<synchronous>, transform_indices = @transform_4, window_bounds = array<i64: 1, 32>}, {transform_indices = @transform_5, window_bounds = array<i64: 2, 32>}]} {
    %0 = tpu.iota {dimensions = array<i32: 1>} : vector<4x256xi32>
    %c16_i32 = arith.constant 16 : i32
    %c0_i32 = arith.constant 0 : i32
    %1 = arith.cmpi eq, %c16_i32, %c0_i32 : i32
    %c1_i32 = arith.constant 1 : i32
    %2 = arith.select %1, %c1_i32, %c16_i32 : i32
    %3 = vector.broadcast %2 : i32 to vector<4x256xi32>
    %4 = arith.remsi %0, %3 : vector<4x256xi32>
    %c0_i32_0 = arith.constant 0 : i32
    %5 = vector.broadcast %c0_i32_0 : i32 to vector<4x256xi32>
    %6 = arith.cmpi ne, %4, %5 : vector<4x256xi32>
    %c0_i32_1 = arith.constant 0 : i32
    %7 = vector.broadcast %c0_i32_1 : i32 to vector<4x256xi32>
    %8 = arith.cmpi slt, %4, %7 : vector<4x256xi32>
    %c0_i32_2 = arith.constant 0 : i32
    %9 = arith.cmpi slt, %2, %c0_i32_2 : i32
    %10 = vector.broadcast %9 : i1 to vector<4x256xi1>
    %11 = vector.broadcast %10 : vector<4x256xi1> to vector<4x256xi1>
    %12 = arith.xori %8, %11 : vector<4x256xi1>
    %13 = arith.andi %12, %6 : vector<4x256xi1>
    %14 = vector.broadcast %2 : i32 to vector<4x256xi32>
    %15 = arith.addi %4, %14 : vector<4x256xi32>
    %16 = arith.select %13, %15, %4 : vector<4x256xi1>, vector<4x256xi32>
    %c1_i32_3 = arith.constant 1 : i32
    %17 = vector.broadcast %c1_i32_3 : i32 to vector<4x256xi32>
    %18 = arith.cmpi sge, %16, %17 : vector<4x256xi32>
    %c15_i32 = arith.constant 15 : i32
    %19 = vector.broadcast %c15_i32 : i32 to vector<4x256xi32>
    %20 = arith.cmpi slt, %16, %19 : vector<4x256xi32>
    %c0 = arith.constant 0 : index
    %c0_4 = arith.constant 0 : index
    %c0_5 = arith.constant 0 : index
    %21 = vector.load %arg1[%c0, %c0_4, %c0_5] : memref<2x4x256xf32, #tpu.memory_space<vmem>>, vector<1x4x256xf32>
    %22 = vector.shape_cast %21 : vector<1x4x256xf32> to vector<4x256xf32>
    %cst = arith.constant 0.000000e+00 : f32
    %23 = vector.broadcast %cst : f32 to vector<4x17xf32>
    %24 = tpu.concatenate %23, %22, %23 in 1 : vector<4x17xf32>, vector<4x256xf32>, vector<4x17xf32> -> vector<4x290xf32>
    %25 = vector.extract_strided_slice %24 {offsets = [0, 0], sizes = [4, 256], strides = [1, 1]} : vector<4x290xf32> to vector<4x256xf32>
    %cst_6 = arith.constant 0.000000e+00 : f32
    %26 = vector.broadcast %cst_6 : f32 to vector<4x256xf32>
    %27 = arith.select %18, %25, %26 : vector<4x256xi1>, vector<4x256xf32>
    %28 = vector.extract_strided_slice %24 {offsets = [0, 1], sizes = [4, 256], strides = [1, 1]} : vector<4x290xf32> to vector<4x256xf32>
    %29 = vector.extract_strided_slice %24 {offsets = [0, 2], sizes = [4, 256], strides = [1, 1]} : vector<4x290xf32> to vector<4x256xf32>
    %cst_7 = arith.constant 0.000000e+00 : f32
    %30 = vector.broadcast %cst_7 : f32 to vector<4x256xf32>
    %31 = arith.select %20, %29, %30 : vector<4x256xi1>, vector<4x256xf32>
    %32 = vector.extract_strided_slice %24 {offsets = [0, 16], sizes = [4, 256], strides = [1, 1]} : vector<4x290xf32> to vector<4x256xf32>
    %cst_8 = arith.constant 0.000000e+00 : f32
    %33 = vector.broadcast %cst_8 : f32 to vector<4x256xf32>
    %34 = arith.select %18, %32, %33 : vector<4x256xi1>, vector<4x256xf32>
    %35 = vector.extract_strided_slice %24 {offsets = [0, 17], sizes = [4, 256], strides = [1, 1]} : vector<4x290xf32> to vector<4x256xf32>
    %36 = vector.extract_strided_slice %24 {offsets = [0, 18], sizes = [4, 256], strides = [1, 1]} : vector<4x290xf32> to vector<4x256xf32>
    %cst_9 = arith.constant 0.000000e+00 : f32
    %37 = vector.broadcast %cst_9 : f32 to vector<4x256xf32>
    %38 = arith.select %20, %36, %37 : vector<4x256xi1>, vector<4x256xf32>
    %39 = vector.extract_strided_slice %24 {offsets = [0, 32], sizes = [4, 256], strides = [1, 1]} : vector<4x290xf32> to vector<4x256xf32>
    %cst_10 = arith.constant 0.000000e+00 : f32
    %40 = vector.broadcast %cst_10 : f32 to vector<4x256xf32>
    %41 = arith.select %18, %39, %40 : vector<4x256xi1>, vector<4x256xf32>
    %42 = vector.extract_strided_slice %24 {offsets = [0, 33], sizes = [4, 256], strides = [1, 1]} : vector<4x290xf32> to vector<4x256xf32>
    %43 = vector.extract_strided_slice %24 {offsets = [0, 34], sizes = [4, 256], strides = [1, 1]} : vector<4x290xf32> to vector<4x256xf32>
    %cst_11 = arith.constant 0.000000e+00 : f32
    %44 = vector.broadcast %cst_11 : f32 to vector<4x256xf32>
    %45 = arith.select %20, %43, %44 : vector<4x256xi1>, vector<4x256xf32>
    %46 = tpu.concatenate %27, %28, %31, %34, %35, %38, %41, %42, %45 in 0 : vector<4x256xf32>, vector<4x256xf32>, vector<4x256xf32>, vector<4x256xf32>, vector<4x256xf32>, vector<4x256xf32>, vector<4x256xf32>, vector<4x256xf32>, vector<4x256xf32> -> vector<36x256xf32>
    %c0_12 = arith.constant 0 : index
    %c0_13 = arith.constant 0 : index
    %47 = vector.load %arg2[%c0_12, %c0_13] : memref<8x36xf32, #tpu.memory_space<vmem>>, vector<8x36xf32>
    %cst_14 = arith.constant dense<0.000000e+00> : vector<8x256xf32>
    %48 = tpu.matmul %47, %46, %cst_14 {dimension_numbers = #tpu.dot_dimension_numbers<[1], [0], [0], [1], [0, 0, 1, 1], [], []>} : vector<8x36xf32>, vector<36x256xf32>, vector<8x256xf32> -> vector<8x256xf32>
    %c0_15 = arith.constant 0 : index
    %c0_16 = arith.constant 0 : index
    %49 = vector.load %arg3[%c0_15, %c0_16] : memref<8x1xf32, #tpu.memory_space<vmem>>, vector<8x1xf32>
    %50 = vector.broadcast %49 : vector<8x1xf32> to vector<8x256xf32>
    %51 = arith.addf %48, %50 : vector<8x256xf32>
    %cst_17 = arith.constant 0.000000e+00 : f32
    %52 = vector.broadcast %cst_17 : f32 to vector<8x256xf32>
    %53 = arith.maximumf %51, %52 : vector<8x256xf32>
    %c1 = arith.constant 1 : index
    %c0_18 = arith.constant 0 : index
    %c0_19 = arith.constant 0 : index
    %54 = vector.load %arg1[%c1, %c0_18, %c0_19] : memref<2x4x256xf32, #tpu.memory_space<vmem>>, vector<1x4x256xf32>
    %55 = vector.shape_cast %54 : vector<1x4x256xf32> to vector<4x256xf32>
    %cst_20 = arith.constant 0.000000e+00 : f32
    %56 = vector.broadcast %cst_20 : f32 to vector<4x17xf32>
    %57 = tpu.concatenate %56, %55, %56 in 1 : vector<4x17xf32>, vector<4x256xf32>, vector<4x17xf32> -> vector<4x290xf32>
    %58 = vector.extract_strided_slice %57 {offsets = [0, 0], sizes = [4, 256], strides = [1, 1]} : vector<4x290xf32> to vector<4x256xf32>
    %cst_21 = arith.constant 0.000000e+00 : f32
    %59 = vector.broadcast %cst_21 : f32 to vector<4x256xf32>
    %60 = arith.select %18, %58, %59 : vector<4x256xi1>, vector<4x256xf32>
    %61 = vector.extract_strided_slice %57 {offsets = [0, 1], sizes = [4, 256], strides = [1, 1]} : vector<4x290xf32> to vector<4x256xf32>
    %62 = vector.extract_strided_slice %57 {offsets = [0, 2], sizes = [4, 256], strides = [1, 1]} : vector<4x290xf32> to vector<4x256xf32>
    %cst_22 = arith.constant 0.000000e+00 : f32
    %63 = vector.broadcast %cst_22 : f32 to vector<4x256xf32>
    %64 = arith.select %20, %62, %63 : vector<4x256xi1>, vector<4x256xf32>
    %65 = vector.extract_strided_slice %57 {offsets = [0, 16], sizes = [4, 256], strides = [1, 1]} : vector<4x290xf32> to vector<4x256xf32>
    %cst_23 = arith.constant 0.000000e+00 : f32
    %66 = vector.broadcast %cst_23 : f32 to vector<4x256xf32>
    %67 = arith.select %18, %65, %66 : vector<4x256xi1>, vector<4x256xf32>
    %68 = vector.extract_strided_slice %57 {offsets = [0, 17], sizes = [4, 256], strides = [1, 1]} : vector<4x290xf32> to vector<4x256xf32>
    %69 = vector.extract_strided_slice %57 {offsets = [0, 18], sizes = [4, 256], strides = [1, 1]} : vector<4x290xf32> to vector<4x256xf32>
    %cst_24 = arith.constant 0.000000e+00 : f32
    %70 = vector.broadcast %cst_24 : f32 to vector<4x256xf32>
    %71 = arith.select %20, %69, %70 : vector<4x256xi1>, vector<4x256xf32>
    %72 = vector.extract_strided_slice %57 {offsets = [0, 32], sizes = [4, 256], strides = [1, 1]} : vector<4x290xf32> to vector<4x256xf32>
    %cst_25 = arith.constant 0.000000e+00 : f32
    %73 = vector.broadcast %cst_25 : f32 to vector<4x256xf32>
    %74 = arith.select %18, %72, %73 : vector<4x256xi1>, vector<4x256xf32>
    %75 = vector.extract_strided_slice %57 {offsets = [0, 33], sizes = [4, 256], strides = [1, 1]} : vector<4x290xf32> to vector<4x256xf32>
    %76 = vector.extract_strided_slice %57 {offsets = [0, 34], sizes = [4, 256], strides = [1, 1]} : vector<4x290xf32> to vector<4x256xf32>
    %cst_26 = arith.constant 0.000000e+00 : f32
    %77 = vector.broadcast %cst_26 : f32 to vector<4x256xf32>
    %78 = arith.select %20, %76, %77 : vector<4x256xi1>, vector<4x256xf32>
    %79 = tpu.concatenate %60, %61, %64, %67, %68, %71, %74, %75, %78 in 0 : vector<4x256xf32>, vector<4x256xf32>, vector<4x256xf32>, vector<4x256xf32>, vector<4x256xf32>, vector<4x256xf32>, vector<4x256xf32>, vector<4x256xf32>, vector<4x256xf32> -> vector<36x256xf32>
    %c0_27 = arith.constant 0 : index
    %c0_28 = arith.constant 0 : index
    %80 = vector.load %arg2[%c0_27, %c0_28] : memref<8x36xf32, #tpu.memory_space<vmem>>, vector<8x36xf32>
    %cst_29 = arith.constant dense<0.000000e+00> : vector<8x256xf32>
    %81 = tpu.matmul %80, %79, %cst_29 {dimension_numbers = #tpu.dot_dimension_numbers<[1], [0], [0], [1], [0, 0, 1, 1], [], []>} : vector<8x36xf32>, vector<36x256xf32>, vector<8x256xf32> -> vector<8x256xf32>
    %c0_30 = arith.constant 0 : index
    %c0_31 = arith.constant 0 : index
    %82 = vector.load %arg3[%c0_30, %c0_31] : memref<8x1xf32, #tpu.memory_space<vmem>>, vector<8x1xf32>
    %83 = vector.broadcast %82 : vector<8x1xf32> to vector<8x256xf32>
    %84 = arith.addf %81, %83 : vector<8x256xf32>
    %cst_32 = arith.constant 0.000000e+00 : f32
    %85 = vector.broadcast %cst_32 : f32 to vector<8x256xf32>
    %86 = arith.maximumf %84, %85 : vector<8x256xf32>
    %87 = tpu.concatenate %53, %86 in 0 : vector<8x256xf32>, vector<8x256xf32> -> vector<16x256xf32>
    %c0_33 = arith.constant 0 : index
    %c0_34 = arith.constant 0 : index
    %88 = vector.load %arg4[%c0_33, %c0_34] : memref<256x256xf32, #tpu.memory_space<vmem>>, vector<256x256xf32>
    %cst_35 = arith.constant dense<0.000000e+00> : vector<16x256xf32>
    %89 = tpu.matmul %87, %88, %cst_35 {dimension_numbers = #tpu.dot_dimension_numbers<[1], [0], [0], [1], [0, 0, 1, 1], [], []>} : vector<16x256xf32>, vector<256x256xf32>, vector<16x256xf32> -> vector<16x256xf32>
    %c0_36 = arith.constant 0 : index
    %c0_37 = arith.constant 0 : index
    %90 = vector.load %arg5[%c0_36, %c0_37] : memref<1x32xf32, #tpu.memory_space<vmem>>, vector<1x32xf32>
    %91 = vector.extract_strided_slice %89 {offsets = [0, 0], sizes = [1, 32], strides = [1, 1]} : vector<16x256xf32> to vector<1x32xf32>
    %92 = arith.addf %90, %91 : vector<1x32xf32>
    %93 = vector.extract_strided_slice %89 {offsets = [1, 32], sizes = [1, 32], strides = [1, 1]} : vector<16x256xf32> to vector<1x32xf32>
    %94 = arith.addf %92, %93 : vector<1x32xf32>
    %95 = vector.extract_strided_slice %89 {offsets = [2, 64], sizes = [1, 32], strides = [1, 1]} : vector<16x256xf32> to vector<1x32xf32>
    %96 = arith.addf %94, %95 : vector<1x32xf32>
    %97 = vector.extract_strided_slice %89 {offsets = [3, 96], sizes = [1, 32], strides = [1, 1]} : vector<16x256xf32> to vector<1x32xf32>
    %98 = arith.addf %96, %97 : vector<1x32xf32>
    %99 = vector.extract_strided_slice %89 {offsets = [4, 128], sizes = [1, 32], strides = [1, 1]} : vector<16x256xf32> to vector<1x32xf32>
    %100 = arith.addf %98, %99 : vector<1x32xf32>
    %101 = vector.extract_strided_slice %89 {offsets = [5, 160], sizes = [1, 32], strides = [1, 1]} : vector<16x256xf32> to vector<1x32xf32>
    %102 = arith.addf %100, %101 : vector<1x32xf32>
    %103 = vector.extract_strided_slice %89 {offsets = [6, 192], sizes = [1, 32], strides = [1, 1]} : vector<16x256xf32> to vector<1x32xf32>
    %104 = arith.addf %102, %103 : vector<1x32xf32>
    %105 = vector.extract_strided_slice %89 {offsets = [7, 224], sizes = [1, 32], strides = [1, 1]} : vector<16x256xf32> to vector<1x32xf32>
    %106 = arith.addf %104, %105 : vector<1x32xf32>
    %c0_38 = arith.constant 0 : index
    %c0_39 = arith.constant 0 : index
    %107 = vector.load %arg5[%c0_38, %c0_39] : memref<1x32xf32, #tpu.memory_space<vmem>>, vector<1x32xf32>
    %108 = vector.extract_strided_slice %89 {offsets = [8, 0], sizes = [1, 32], strides = [1, 1]} : vector<16x256xf32> to vector<1x32xf32>
    %109 = arith.addf %107, %108 : vector<1x32xf32>
    %110 = vector.extract_strided_slice %89 {offsets = [9, 32], sizes = [1, 32], strides = [1, 1]} : vector<16x256xf32> to vector<1x32xf32>
    %111 = arith.addf %109, %110 : vector<1x32xf32>
    %112 = vector.extract_strided_slice %89 {offsets = [10, 64], sizes = [1, 32], strides = [1, 1]} : vector<16x256xf32> to vector<1x32xf32>
    %113 = arith.addf %111, %112 : vector<1x32xf32>
    %114 = vector.extract_strided_slice %89 {offsets = [11, 96], sizes = [1, 32], strides = [1, 1]} : vector<16x256xf32> to vector<1x32xf32>
    %115 = arith.addf %113, %114 : vector<1x32xf32>
    %116 = vector.extract_strided_slice %89 {offsets = [12, 128], sizes = [1, 32], strides = [1, 1]} : vector<16x256xf32> to vector<1x32xf32>
    %117 = arith.addf %115, %116 : vector<1x32xf32>
    %118 = vector.extract_strided_slice %89 {offsets = [13, 160], sizes = [1, 32], strides = [1, 1]} : vector<16x256xf32> to vector<1x32xf32>
    %119 = arith.addf %117, %118 : vector<1x32xf32>
    %120 = vector.extract_strided_slice %89 {offsets = [14, 192], sizes = [1, 32], strides = [1, 1]} : vector<16x256xf32> to vector<1x32xf32>
    %121 = arith.addf %119, %120 : vector<1x32xf32>
    %122 = vector.extract_strided_slice %89 {offsets = [15, 224], sizes = [1, 32], strides = [1, 1]} : vector<16x256xf32> to vector<1x32xf32>
    %123 = arith.addf %121, %122 : vector<1x32xf32>
    %124 = tpu.concatenate %106, %123 in 0 : vector<1x32xf32>, vector<1x32xf32> -> vector<2x32xf32>
    %c0_40 = arith.constant 0 : index
    %c0_41 = arith.constant 0 : index
    %125 = vector.load %arg6[%c0_40, %c0_41] : memref<2x32xf32, #tpu.memory_space<vmem>>, vector<2x32xf32>
    tpu.vector_store %arg6[%c0_40, %c0_41], %124 {strides = array<i32>} : memref<2x32xf32, #tpu.memory_space<vmem>>, vector<2x32xf32>,
    return
  }
  func.func @transform_0(%arg0: i32) -> (i32, i32, i32) {
    %c0_i32 = arith.constant 0 : i32
    %c0_i32_0 = arith.constant 0 : i32
    %c0_i32_1 = arith.constant 0 : i32
    return %arg0, %c0_i32, %c0_i32_0 : i32, i32, i32
  }
  func.func @transform_1(%arg0: i32) -> (i32, i32) {
    %c0_i32 = arith.constant 0 : i32
    %c0_i32_0 = arith.constant 0 : i32
    %c0_i32_1 = arith.constant 0 : i32
    return %c0_i32, %c0_i32_0 : i32, i32
  }
  func.func @transform_2(%arg0: i32) -> (i32, i32) {
    %c0_i32 = arith.constant 0 : i32
    %c0_i32_0 = arith.constant 0 : i32
    %c0_i32_1 = arith.constant 0 : i32
    return %c0_i32, %c0_i32_0 : i32, i32
  }
  func.func @transform_3(%arg0: i32) -> (i32, i32) {
    %c0_i32 = arith.constant 0 : i32
    %c0_i32_0 = arith.constant 0 : i32
    %c0_i32_1 = arith.constant 0 : i32
    return %c0_i32, %c0_i32_0 : i32, i32
  }
  func.func @transform_4(%arg0: i32) -> (i32, i32) {
    %c0_i32 = arith.constant 0 : i32
    %c0_i32_0 = arith.constant 0 : i32
    %c0_i32_1 = arith.constant 0 : i32
    return %c0_i32, %c0_i32_0 : i32, i32
  }
  func.func @transform_5(%arg0: i32) -> (i32, i32) {
    %c0_i32 = arith.constant 0 : i32
    %c0_i32_0 = arith.constant 0 : i32
    return %arg0, %c0_i32 : i32, i32
  }
}

</mosaic_0001>

<llo_original>
// kernel: fused_dag_forward.1
$region0: #{fused_dag_forward.1}
  #allocation0 [shape = 'u32[]', space=smem, size = 0x4, offset = 0x4, fixed_abs, tag = 'smem constant byte address 0x4 - core index']
  #allocation1 [shape = 'u32[144,128]{1,0:T(1,128)}', space=vmem, size = 0x12000, scoped, tag = 'internal scratch']
  %s0 = inlined_call_operand.vmem [shape: f32[2,4,256], index: 0, kind: input, shape index: {}]
  %s1 = inlined_call_operand.vmem [shape: f32[8,36], index: 1, kind: input, shape index: {}]
  %s2 = inlined_call_operand.vmem [shape: f32[8,1], index: 2, kind: input, shape index: {}]
  %s3 = inlined_call_operand.hbm [shape: f32[256,256], index: 3, kind: input, shape index: {}]
  %s4 = inlined_call_operand.vmem [shape: f32[1,32], index: 4, kind: input, shape index: {}]
  %s5 = inlined_call_operand.hbm [shape: f32[2,32], index: 5, kind: output, shape index: {}]
  %s6 = sld [smem:[#allocation0]]
  $region34: #{fused_dag_forward.1} parent=0
    _
  %s8 = ssub.s32 1, %s6
  %s9 = scalar_select 0, %s8, %s6
  $region1: #{fused_dag_forward.1} parent=0
    #allocation2 [shape = 'u8[262144]{0}', space=vmem, size = 0x40000, scoped, tag = 'input window, operand 3, single buffered']
    #allocation3 [shape = 's32[1]{0}', space=sflag, size = 0x4, scoped, tag = 'scoped memory for fused_dag_forward.1']
    #allocation4 [shape = 's32[1]{0}', space=sflag, size = 0x4, scoped, tag = 'scoped memory for fused_dag_forward.1']
    #allocation5 [shape = 'u8[1024]{0}', space=vmem, size = 0x400, scoped, tag = 'output window, operand 0, single buffered']
    %10 = vsyncpa [#allocation3], 0
    %11 = vsyncpa [#allocation4], 0
    // Predicated region
    $region2: #{fused_dag_forward.1} parent=1 // pred_check
      _
    $region3: #{fused_dag_forward.1} parent=1 // pred_check_branch
      %13 = sbr.rel (0) target = $region5
    $region4: #{fused_dag_forward.1} parent=1 // pred_region
      _
    $region5: #{fused_dag_forward.1} parent=1 // pred_fallthru
      _
    // Predicated region
    $region6: #{fused_dag_forward.1} parent=1 // pred_check
      _
    $region7: #{fused_dag_forward.1} parent=1 // pred_check_branch
      %15 = sbr.rel (0) target = $region9
    $region8: #{fused_dag_forward.1} parent=1 // pred_region
      _
    $region9: #{fused_dag_forward.1} parent=1 // pred_fallthru
      _
    // Predicated region
    $region10: #{fused_dag_forward.1} parent=1 // pred_check
      _
    $region11: #{fused_dag_forward.1} parent=1 // pred_check_branch
      %17 = sbr.rel (0) target = $region13
    $region12: #{fused_dag_forward.1} parent=1 // pred_region
      _
    $region13: #{fused_dag_forward.1} parent=1 // pred_fallthru
      _
    // Predicated region
    $region14: #{fused_dag_forward.1} parent=1 // pred_check
      _
    $region15: #{fused_dag_forward.1} parent=1 // pred_check_branch
      %19 = sbr.rel (0) target = $region17
    $region16: #{fused_dag_forward.1} parent=1 // pred_region
      %s21 = ssub.s32 8192, 8192
      %22 = vsyncadd [#allocation3], %s21
      %s23 = sshll.u32 [#allocation2], 4
      %s24 = int_to_ptr.vmem [resolvable:$true] %s23
      %29 = dma.hbm_to_vmem [thread:$0]  %s3, 8192, %s24, [#allocation3], 256, 256, 16
    $region17: #{fused_dag_forward.1} parent=1 // pred_fallthru
      _
    // Predicated region
    $region18: #{fused_dag_forward.1} parent=1 // pred_check
      _
    $region19: #{fused_dag_forward.1} parent=1 // pred_check_branch
      %31 = sbr.rel (0) target = $region21
    $region20: #{fused_dag_forward.1} parent=1 // pred_region
      _
    $region21: #{fused_dag_forward.1} parent=1 // pred_fallthru
      _
    // Predicated region
    $region22: #{fused_dag_forward.1} parent=1 // pred_check
      _
    $region23: #{fused_dag_forward.1} parent=1 // pred_check_branch
      %33 = sbr.rel (0) target = $region25
    $region24: #{fused_dag_forward.1} parent=1 // pred_region
      %34 = dma.done [#allocation3], 8192
    $region25: #{fused_dag_forward.1} parent=1 // pred_fallthru
      _
    %v35 = vlaneseq
    %v36 = vand.u32 %v35, 127
    %v37 = vadd.s32 %v36, 128
    %vm38 = vcmp.lt.s32.totalorder %v36, 0
    %v39 = vsub.s32 0, %v36
    %v40 = vsel %vm38, %v39, %v36
    %v41 = vshrl.u32 %v40, 4
    %v42 = vand.u32 %v40, 15
    %v43 = vsub.s32 0, %v42
    %v44 = vsel %vm38, %v43, %v42
    %vm45 = vcmp.lt.s32.totalorder %v37, 0
    %v46 = vsub.s32 0, %v37
    %v47 = vsel %vm45, %v46, %v37
    %v48 = vshrl.u32 %v47, 4
    %v49 = vand.u32 %v47, 15
    %v50 = vsub.s32 0, %v49
    %v51 = vsel %vm45, %v50, %v49
    %vm52 = vcmp.ne.s32.totalorder %v44, 0
    %vm53 = vcmp.ne.s32.totalorder %v51, 0
    %vm54 = vcmp.lt.s32.totalorder %v44, 0
    %vm55 = vcmp.lt.s32.totalorder %v51, 0
    %vm56 = vmand %vm54, %vm52
    %vm57 = vmand %vm55, %vm53
    %v58 = vadd.s32 %v44, 16
    %v59 = vadd.s32 %v51, 16
    %v60 = vsel %vm56, %v58, %v44
    %v61 = vsel %vm57, %v59, %v51
    %vm62 = vcmp.ge.s32.totalorder %v60, 1
    %vm63 = vcmp.ge.s32.totalorder %v61, 1
    %vm64 = vcmp.lt.s32.totalorder %v60, 15
    %vm65 = vcmp.lt.s32.totalorder %v61, 15
    %v66 = vld [vmem:[%s0] sm:$0xff]
    %v68 = vcombine.high %v66, %v66
    %69 = vrot.lane.b32.xlu0 %v66, 17
    %v70 = vpop.permute.xlu0 %69
    %71 = vrot.lane.b32.xlu0 %v68, 17
    %v72 = vpop.permute.xlu0 %71
    %vm73 = vcmask 138240
    %v74 = vsel %vm73, %v70, %v72
    %v78 = vsel %vm73, 0.0, %v70
    %v79 = vsel %vm73, %v72, 0.0
    %v80 = vsel %vm62, %v78, 0.0
    %v81 = vsel %vm63, %v74, 0.0
    %84 = vrot.lane.b32.xlu0 %v78, 126
    %v85 = vpop.permute.xlu0 %84
    %86 = vrot.lane.b32.xlu0 %v74, 126
    %v87 = vpop.permute.xlu0 %86
    %88 = vrot.lane.b32.xlu0 %v79, 126
    %v89 = vpop.permute.xlu0 %88
    %vm90 = vcmask 1031168
    %v91 = vsel %vm90, %v85, %v87
    %v92 = vsel %vm90, %v87, %v89
    %v95 = vsel %vm64, %v91, 0.0
    %v96 = vsel %vm65, %v92, 0.0
    %97 = vrot.lane.b32.xlu0 %v78, 112
    %v98 = vpop.permute.xlu0 %97
    %99 = vrot.lane.b32.xlu0 %v74, 112
    %v100 = vpop.permute.xlu0 %99
    %101 = vrot.lane.b32.xlu0 %v79, 112
    %v102 = vpop.permute.xlu0 %101
    %vm103 = vcmask 916480
    %v104 = vsel %vm103, %v98, %v100
    %v105 = vsel %vm103, %v100, %v102
    %v108 = vsel %vm62, %v104, 0.0
    %v109 = vsel %vm63, %v105, 0.0
    %110 = vrot.lane.b32.xlu0 %v78, 110
    %v111 = vpop.permute.xlu0 %110
    %112 = vrot.lane.b32.xlu0 %v74, 110
    %v113 = vpop.permute.xlu0 %112
    %114 = vrot.lane.b32.xlu0 %v79, 110
    %v115 = vpop.permute.xlu0 %114
    %vm116 = vcmask 900096
    %v117 = vsel %vm116, %v111, %v113
    %v118 = vsel %vm116, %v113, %v115
    %v121 = vsel %vm64, %v117, 0.0
    %v122 = vsel %vm65, %v118, 0.0
    %123 = vrot.lane.b32.xlu0 %v78, 96
    %v124 = vpop.permute.xlu0 %123
    %125 = vrot.lane.b32.xlu0 %v74, 96
    %v126 = vpop.permute.xlu0 %125
    %127 = vrot.lane.b32.xlu0 %v79, 96
    %v128 = vpop.permute.xlu0 %127
    %vm129 = vcmask 785408
    %v130 = vsel %vm129, %v124, %v126
    %v131 = vsel %vm129, %v126, %v128
    %v134 = vsel %vm62, %v130, 0.0
    %v135 = vsel %vm63, %v131, 0.0
    %136 = vrot.lane.b32.xlu0 %v78, 94
    %v137 = vpop.permute.xlu0 %136
    %138 = vrot.lane.b32.xlu0 %v74, 94
    %v139 = vpop.permute.xlu0 %138
    %140 = vrot.lane.b32.xlu0 %v79, 94
    %v141 = vpop.permute.xlu0 %140
    %vm142 = vcmask 769024
    %v143 = vsel %vm142, %v137, %v139
    %v144 = vsel %vm142, %v139, %v141
    %v147 = vsel %vm64, %v143, 0.0
    %v148 = vsel %vm65, %v144, 0.0
    %v149 = vrot.slane %v78, 4
    %v150 = vrot.slane %v74, 4
    %v151 = vrot.slane %v79, 4
    %152 = vrot.lane.b32.xlu0 %v149, 127
    %v153 = vpop.permute.xlu0 %152
    %154 = vrot.lane.b32.xlu0 %v150, 127
    %v155 = vpop.permute.xlu0 %154
    %156 = vrot.lane.b32.xlu0 %v151, 127
    %v157 = vpop.permute.xlu0 %156
    %vm158 = vcmask 1039360
    %v159 = vsel %vm158, %v153, %v155
    %v160 = vsel %vm158, %v155, %v157
    %v165 = vrot.slane %v108, 4
    %v166 = vrot.slane %v109, 4
    %169 = vrot.lane.b32.xlu0 %v78, 111
    %v170 = vpop.permute.xlu0 %169
    %171 = vrot.lane.b32.xlu0 %v74, 111
    %v172 = vpop.permute.xlu0 %171
    %173 = vrot.lane.b32.xlu0 %v79, 111
    %v174 = vpop.permute.xlu0 %173
    %vm175 = vcmask 908288
    %v176 = vsel %vm175, %v170, %v172
    %v177 = vsel %vm175, %v172, %v174
    %v182 = vrot.slane %v121, 4
    %v183 = vrot.slane %v122, 4
    %186 = vrot.lane.b32.xlu0 %v149, 95
    %v187 = vpop.permute.xlu0 %186
    %188 = vrot.lane.b32.xlu0 %v150, 95
    %v189 = vpop.permute.xlu0 %188
    %190 = vrot.lane.b32.xlu0 %v151, 95
    %v191 = vpop.permute.xlu0 %190
    %vm192 = vcmask 777216
    %v193 = vsel %vm192, %v187, %v189
    %v194 = vsel %vm192, %v189, %v191
    %vm197 = vcmask 1043456
    %v198 = vsel %vm197, %v80, %v159
    %v199 = vsel %vm197, %v81, %v160
    %v200 = vsel %vm197, %v95, %v165
    %v201 = vsel %vm197, %v96, %v166
    %v202 = vsel %vm197, %v176, %v182
    %v203 = vsel %vm197, %v177, %v183
    %v204 = vsel %vm197, %v134, %v193
    %v205 = vsel %vm197, %v135, %v194
    %v206 = vld [vmem:[%s1] sm:$0xff]
    %v207 = vld [vmem:[%s2] sm:$0xff]
    %209 = vset.pattern.permute.xlu0 0
    %210 = vperm.xlu0 %209, %v207
    %v211 = vpop.permute.xlu0 %210
    %vm213 = vcmask 293888
    %v215 = vsel %vm213, %v206, 0
    %v218 = vsel %vm197, %v147, 0
    %v221 = vsel %vm197, %v148, 0
    %223 = vmatprep.subr.mxu0 0.0
    %224 = vmatpush1.msra.mxu0 0.0
    %225 = vmatprep.subr.mxu0 0.0
    %226 = vmatpush1.msra.mxu0 0.0
    %227 = vmatprep.subr.mxu0 0.0
    %228 = vmatpush1.msra.mxu0 0.0
    %229 = vmatprep.subr.mxu0 0.0
    %230 = vmatpush1.msra.mxu0 0.0
    %231 = vmatprep.subr.mxu0 0.0
    %232 = vmatpush1.msra.mxu0 0.0
    %233 = vmatprep.subr.mxu0 0.0
    %234 = vmatpush1.msra.mxu0 0.0
    %235 = vmatprep.subr.mxu0 0.0
    %236 = vmatpush1.msra.mxu0 0.0
    %237 = vmatprep.subr.mxu0 0.0
    %238 = vmatpush1.msra.mxu0 0.0
    %239 = vmatprep.subr.mxu0 0.0
    %240 = vmatpush1.msra.mxu0 0.0
    %241 = vmatprep.subr.mxu0 0.0
    %242 = vmatpush1.msra.mxu0 0.0
    %243 = vmatprep.subr.mxu0 0.0
    %244 = vmatpush1.msra.mxu0 0.0
    %245 = vmatprep.subr.mxu0 %v221
    %246 = vmatpush1.msra.mxu0 %v218
    %247 = vmatprep.subr.mxu0 %v205
    %248 = vmatpush1.msra.mxu0 %v204
    %249 = vmatprep.subr.mxu0 %v203
    %250 = vmatpush1.msra.mxu0 %v202
    %251 = vmatprep.subr.mxu0 %v201
    %252 = vmatpush1.msra.mxu0 %v200
    %253 = vmatprep.subr.mxu0 %v199
    %254 = vmatpush1.msra.mxu0 %v198
    %255 = vmatprep.subr.mxu0 0.0
    %256 = vmatpush2.msra.mxu0 0.0
    %257 = vmatprep.subr.mxu0 0.0
    %258 = vmatpush2.msra.mxu0 0.0
    %259 = vmatprep.subr.mxu0 0.0
    %260 = vmatpush2.msra.mxu0 0.0
    %261 = vmatprep.subr.mxu0 0.0
    %262 = vmatpush2.msra.mxu0 0.0
    %263 = vmatprep.subr.mxu0 0.0
    %264 = vmatpush2.msra.mxu0 0.0
    %265 = vmatprep.subr.mxu0 0.0
    %266 = vmatpush2.msra.mxu0 0.0
    %267 = vmatprep.subr.mxu0 0.0
    %268 = vmatpush2.msra.mxu0 0.0
    %269 = vmatprep.subr.mxu0 0.0
    %270 = vmatpush2.msra.mxu0 0.0
    %271 = vmatprep.subr.mxu0 0.0
    %272 = vmatpush2.msra.mxu0 0.0
    %273 = vmatprep.subr.mxu0 0.0
    %274 = vmatpush2.msra.mxu0 0.0
    %275 = vmatprep.subr.mxu0 0.0
    %276 = vmatpush2.msra.mxu0 0.0
    %277 = vmatprep.subr.mxu0 0.0
    %278 = vmatpush2.msra.mxu0 0.0
    %279 = vmatprep.subr.mxu0 0.0
    %280 = vmatpush2.msra.mxu0 0.0
    %281 = vmatprep.subr.mxu0 0.0
    %282 = vmatpush2.msra.mxu0 0.0
    %283 = vmatprep.subr.mxu0 0.0
    %284 = vmatpush2.msra.mxu0 0.0
    %285 = vmatprep.subr.mxu0 0.0
    %286 = vmatpush2.msra.mxu0 0.0
    %287 = vmatprep.mubr.f32.mxu0 0.0
    %288 = vmatmul.mubr.f32.gmra.mxu0 %v215
    %v289 = vpop.f32.mrf.mxu0
    %v290 = vadd.f32 %v211, %v289
    %v291 = vpop.f32.mrf.mxu0
    %v292 = vadd.f32 %v211, %v291
    %293 = vdwg.mxu0
    %v294 = vmax.f32 %v290, 0.0
    %v295 = vmax.f32 %v292, 0.0
    %s296 = scalar_lea.vmem %s0, 8
    %v297 = vld [vmem:[%s296] sm:$0xff]
    %v299 = vcombine.high %v297, %v297
    %300 = vrot.lane.b32.xlu0 %v297, 17
    %v301 = vpop.permute.xlu0 %300
    %302 = vrot.lane.b32.xlu0 %v299, 17
    %v303 = vpop.permute.xlu0 %302
    %v304 = vsel %vm73, %v301, %v303
    %v308 = vsel %vm73, 0.0, %v301
    %v309 = vsel %vm73, %v303, 0.0
    %v310 = vsel %vm62, %v308, 0.0
    %v311 = vsel %vm63, %v304, 0.0
    %314 = vrot.lane.b32.xlu0 %v308, 126
    %v315 = vpop.permute.xlu0 %314
    %316 = vrot.lane.b32.xlu0 %v304, 126
    %v317 = vpop.permute.xlu0 %316
    %318 = vrot.lane.b32.xlu0 %v309, 126
    %v319 = vpop.permute.xlu0 %318
    %v320 = vsel %vm90, %v315, %v317
    %v321 = vsel %vm90, %v317, %v319
    %v324 = vsel %vm64, %v320, 0.0
    %v325 = vsel %vm65, %v321, 0.0
    %326 = vrot.lane.b32.xlu0 %v308, 112
    %v327 = vpop.permute.xlu0 %326
    %328 = vrot.lane.b32.xlu0 %v304, 112
    %v329 = vpop.permute.xlu0 %328
    %330 = vrot.lane.b32.xlu0 %v309, 112
    %v331 = vpop.permute.xlu0 %330
    %v332 = vsel %vm103, %v327, %v329
    %v333 = vsel %vm103, %v329, %v331
    %v336 = vsel %vm62, %v332, 0.0
    %v337 = vsel %vm63, %v333, 0.0
    %338 = vrot.lane.b32.xlu0 %v308, 110
    %v339 = vpop.permute.xlu0 %338
    %340 = vrot.lane.b32.xlu0 %v304, 110
    %v341 = vpop.permute.xlu0 %340
    %342 = vrot.lane.b32.xlu0 %v309, 110
    %v343 = vpop.permute.xlu0 %342
    %v344 = vsel %vm116, %v339, %v341
    %v345 = vsel %vm116, %v341, %v343
    %v348 = vsel %vm64, %v344, 0.0
    %v349 = vsel %vm65, %v345, 0.0
    %350 = vrot.lane.b32.xlu0 %v308, 96
    %v351 = vpop.permute.xlu0 %350
    %352 = vrot.lane.b32.xlu0 %v304, 96
    %v353 = vpop.permute.xlu0 %352
    %354 = vrot.lane.b32.xlu0 %v309, 96
    %v355 = vpop.permute.xlu0 %354
    %v356 = vsel %vm129, %v351, %v353
    %v357 = vsel %vm129, %v353, %v355
    %v360 = vsel %vm62, %v356, 0.0
    %v361 = vsel %vm63, %v357, 0.0
    %362 = vrot.lane.b32.xlu0 %v308, 94
    %v363 = vpop.permute.xlu0 %362
    %364 = vrot.lane.b32.xlu0 %v304, 94
    %v365 = vpop.permute.xlu0 %364
    %366 = vrot.lane.b32.xlu0 %v309, 94
    %v367 = vpop.permute.xlu0 %366
    %v368 = vsel %vm142, %v363, %v365
    %v369 = vsel %vm142, %v365, %v367
    %v372 = vsel %vm64, %v368, 0.0
    %v373 = vsel %vm65, %v369, 0.0
    %v374 = vrot.slane %v308, 4
    %v375 = vrot.slane %v304, 4
    %v376 = vrot.slane %v309, 4
    %377 = vrot.lane.b32.xlu0 %v374, 127
    %v378 = vpop.permute.xlu0 %377
    %379 = vrot.lane.b32.xlu0 %v375, 127
    %v380 = vpop.permute.xlu0 %379
    %381 = vrot.lane.b32.xlu0 %v376, 127
    %v382 = vpop.permute.xlu0 %381
    %v383 = vsel %vm158, %v378, %v380
    %v384 = vsel %vm158, %v380, %v382
    %v389 = vrot.slane %v336, 4
    %v390 = vrot.slane %v337, 4
    %393 = vrot.lane.b32.xlu0 %v308, 111
    %v394 = vpop.permute.xlu0 %393
    %395 = vrot.lane.b32.xlu0 %v304, 111
    %v396 = vpop.permute.xlu0 %395
    %397 = vrot.lane.b32.xlu0 %v309, 111
    %v398 = vpop.permute.xlu0 %397
    %v399 = vsel %vm175, %v394, %v396
    %v400 = vsel %vm175, %v396, %v398
    %v405 = vrot.slane %v348, 4
    %v406 = vrot.slane %v349, 4
    %409 = vrot.lane.b32.xlu0 %v374, 95
    %v410 = vpop.permute.xlu0 %409
    %411 = vrot.lane.b32.xlu0 %v375, 95
    %v412 = vpop.permute.xlu0 %411
    %413 = vrot.lane.b32.xlu0 %v376, 95
    %v414 = vpop.permute.xlu0 %413
    %v415 = vsel %vm192, %v410, %v412
    %v416 = vsel %vm192, %v412, %v414
    %v419 = vsel %vm197, %v310, %v383
    %v420 = vsel %vm197, %v311, %v384
    %v421 = vsel %vm197, %v324, %v389
    %v422 = vsel %vm197, %v325, %v390
    %v423 = vsel %vm197, %v399, %v405
    %v424 = vsel %vm197, %v400, %v406
    %v425 = vsel %vm197, %v360, %v415
    %v426 = vsel %vm197, %v361, %v416
    %v428 = vsel %vm197, %v372, 0
    %v431 = vsel %vm197, %v373, 0
    %433 = vmatprep.subr.mxu0 0.0
    %434 = vmatpush1.msra.mxu0 0.0
    %435 = vmatprep.subr.mxu0 0.0
    %436 = vmatpush1.msra.mxu0 0.0
    %437 = vmatprep.subr.mxu0 0.0
    %438 = vmatpush1.msra.mxu0 0.0
    %439 = vmatprep.subr.mxu0 0.0
    %440 = vmatpush1.msra.mxu0 0.0
    %441 = vmatprep.subr.mxu0 0.0
    %442 = vmatpush1.msra.mxu0 0.0
    %443 = vmatprep.subr.mxu0 0.0
    %444 = vmatpush1.msra.mxu0 0.0
    %445 = vmatprep.subr.mxu0 0.0
    %446 = vmatpush1.msra.mxu0 0.0
    %447 = vmatprep.subr.mxu0 0.0
    %448 = vmatpush1.msra.mxu0 0.0
    %449 = vmatprep.subr.mxu0 0.0
    %450 = vmatpush1.msra.mxu0 0.0
    %451 = vmatprep.subr.mxu0 0.0
    %452 = vmatpush1.msra.mxu0 0.0
    %453 = vmatprep.subr.mxu0 0.0
    %454 = vmatpush1.msra.mxu0 0.0
    %455 = vmatprep.subr.mxu0 %v431
    %456 = vmatpush1.msra.mxu0 %v428
    %457 = vmatprep.subr.mxu0 %v426
    %458 = vmatpush1.msra.mxu0 %v425
    %459 = vmatprep.subr.mxu0 %v424
    %460 = vmatpush1.msra.mxu0 %v423
    %461 = vmatprep.subr.mxu0 %v422
    %462 = vmatpush1.msra.mxu0 %v421
    %463 = vmatprep.subr.mxu0 %v420
    %464 = vmatpush1.msra.mxu0 %v419
    %465 = vmatprep.subr.mxu0 0.0
    %466 = vmatpush2.msra.mxu0 0.0
    %467 = vmatprep.subr.mxu0 0.0
    %468 = vmatpush2.msra.mxu0 0.0
    %469 = vmatprep.subr.mxu0 0.0
    %470 = vmatpush2.msra.mxu0 0.0
    %471 = vmatprep.subr.mxu0 0.0
    %472 = vmatpush2.msra.mxu0 0.0
    %473 = vmatprep.subr.mxu0 0.0
    %474 = vmatpush2.msra.mxu0 0.0
    %475 = vmatprep.subr.mxu0 0.0
    %476 = vmatpush2.msra.mxu0 0.0
    %477 = vmatprep.subr.mxu0 0.0
    %478 = vmatpush2.msra.mxu0 0.0
    %479 = vmatprep.subr.mxu0 0.0
    %480 = vmatpush2.msra.mxu0 0.0
    %481 = vmatprep.subr.mxu0 0.0
    %482 = vmatpush2.msra.mxu0 0.0
    %483 = vmatprep.subr.mxu0 0.0
    %484 = vmatpush2.msra.mxu0 0.0
    %485 = vmatprep.subr.mxu0 0.0
    %486 = vmatpush2.msra.mxu0 0.0
    %487 = vmatprep.subr.mxu0 0.0
    %488 = vmatpush2.msra.mxu0 0.0
    %489 = vmatprep.subr.mxu0 0.0
    %490 = vmatpush2.msra.mxu0 0.0
    %491 = vmatprep.subr.mxu0 0.0
    %492 = vmatpush2.msra.mxu0 0.0
    %493 = vmatprep.subr.mxu0 0.0
    %494 = vmatpush2.msra.mxu0 0.0
    %495 = vmatprep.subr.mxu0 0.0
    %496 = vmatpush2.msra.mxu0 0.0
    %497 = vmatprep.mubr.f32.mxu0 0.0
    %498 = vmatmul.mubr.f32.gmra.mxu0 %v215
    %v499 = vpop.f32.mrf.mxu0
    %v500 = vadd.f32 %v211, %v499
    %v501 = vpop.f32.mrf.mxu0
    %v502 = vadd.f32 %v211, %v501
    %503 = vdwg.mxu0
    %v504 = vmax.f32 %v500, 0.0
    %v505 = vmax.f32 %v502, 0.0
    %v506 = vld [vmem:[#allocation2] sm:$0xff]
    %v507 = vld [vmem:[#allocation2 + $0x8] sm:$0xff]
    %v508 = vld [vmem:[#allocation2 + $0x10] sm:$0xff]
    %v509 = vld [vmem:[#allocation2 + $0x18] sm:$0xff]
    %v510 = vld [vmem:[#allocation2 + $0x20] sm:$0xff]
    %v511 = vld [vmem:[#allocation2 + $0x28] sm:$0xff]
    %v512 = vld [vmem:[#allocation2 + $0x30] sm:$0xff]
    %v513 = vld [vmem:[#allocation2 + $0x38] sm:$0xff]
    %v514 = vld [vmem:[#allocation2 + $0x40] sm:$0xff]
    %v515 = vld [vmem:[#allocation2 + $0x48] sm:$0xff]
    %v516 = vld [vmem:[#allocation2 + $0x50] sm:$0xff]
    %v517 = vld [vmem:[#allocation2 + $0x58] sm:$0xff]
    %v518 = vld [vmem:[#allocation2 + $0x60] sm:$0xff]
    %v519 = vld [vmem:[#allocation2 + $0x68] sm:$0xff]
    %v520 = vld [vmem:[#allocation2 + $0x70] sm:$0xff]
    %v521 = vld [vmem:[#allocation2 + $0x78] sm:$0xff]
    %v522 = vld [vmem:[#allocation2 + $0x80] sm:$0xff]
    %v523 = vld [vmem:[#allocation2 + $0x88] sm:$0xff]
    %v524 = vld [vmem:[#allocation2 + $0x90] sm:$0xff]
    %v525 = vld [vmem:[#allocation2 + $0x98] sm:$0xff]
    %v526 = vld [vmem:[#allocation2 + $0xa0] sm:$0xff]
    %v527 = vld [vmem:[#allocation2 + $0xa8] sm:$0xff]
    %v528 = vld [vmem:[#allocation2 + $0xb0] sm:$0xff]
    %v529 = vld [vmem:[#allocation2 + $0xb8] sm:$0xff]
    %v530 = vld [vmem:[#allocation2 + $0xc0] sm:$0xff]
    %v531 = vld [vmem:[#allocation2 + $0xc8] sm:$0xff]
    %v532 = vld [vmem:[#allocation2 + $0xd0] sm:$0xff]
    %v533 = vld [vmem:[#allocation2 + $0xd8] sm:$0xff]
    %v534 = vld [vmem:[#allocation2 + $0xe0] sm:$0xff]
    %v535 = vld [vmem:[#allocation2 + $0xe8] sm:$0xff]
    %v536 = vld [vmem:[#allocation2 + $0xf0] sm:$0xff]
    %v537 = vld [vmem:[#allocation2 + $0xf8] sm:$0xff]
    %v538 = vld [vmem:[#allocation2 + $0x100] sm:$0xff]
    %v539 = vld [vmem:[#allocation2 + $0x108] sm:$0xff]
    %v540 = vld [vmem:[#allocation2 + $0x110] sm:$0xff]
    %v541 = vld [vmem:[#allocation2 + $0x118] sm:$0xff]
    %v542 = vld [vmem:[#allocation2 + $0x120] sm:$0xff]
    %v543 = vld [vmem:[#allocation2 + $0x128] sm:$0xff]
    %v544 = vld [vmem:[#allocation2 + $0x130] sm:$0xff]
    %v545 = vld [vmem:[#allocation2 + $0x138] sm:$0xff]
    %v546 = vld [vmem:[#allocation2 + $0x140] sm:$0xff]
    %v547 = vld [vmem:[#allocation2 + $0x148] sm:$0xff]
    %v548 = vld [vmem:[#allocation2 + $0x150] sm:$0xff]
    %v549 = vld [vmem:[#allocation2 + $0x158] sm:$0xff]
    %v550 = vld [vmem:[#allocation2 + $0x160] sm:$0xff]
    %v551 = vld [vmem:[#allocation2 + $0x168] sm:$0xff]
    %v552 = vld [vmem:[#allocation2 + $0x170] sm:$0xff]
    %v553 = vld [vmem:[#allocation2 + $0x178] sm:$0xff]
    %v554 = vld [vmem:[#allocation2 + $0x180] sm:$0xff]
    %v555 = vld [vmem:[#allocation2 + $0x188] sm:$0xff]
    %v556 = vld [vmem:[#allocation2 + $0x190] sm:$0xff]
    %v557 = vld [vmem:[#allocation2 + $0x198] sm:$0xff]
    %v558 = vld [vmem:[#allocation2 + $0x1a0] sm:$0xff]
    %v559 = vld [vmem:[#allocation2 + $0x1a8] sm:$0xff]
    %v560 = vld [vmem:[#allocation2 + $0x1b0] sm:$0xff]
    %v561 = vld [vmem:[#allocation2 + $0x1b8] sm:$0xff]
    %v562 = vld [vmem:[#allocation2 + $0x1c0] sm:$0xff]
    %v563 = vld [vmem:[#allocation2 + $0x1c8] sm:$0xff]
    %v564 = vld [vmem:[#allocation2 + $0x1d0] sm:$0xff]
    %v565 = vld [vmem:[#allocation2 + $0x1d8] sm:$0xff]
    %v566 = vld [vmem:[#allocation2 + $0x1e0] sm:$0xff]
    %v567 = vld [vmem:[#allocation2 + $0x1e8] sm:$0xff]
    %v568 = vld [vmem:[#allocation2 + $0x1f0] sm:$0xff]
    %v569 = vld [vmem:[#allocation2 + $0x1f8] sm:$0xff]
    %570 = vmatprep.subr.mxu0 %v537
    %571 = vmatpush1.msra.mxu0 %v536
    %572 = vmatprep.subr.mxu0 %v535
    %573 = vmatpush1.msra.mxu0 %v534
    %574 = vmatprep.subr.mxu0 %v533
    %575 = vmatpush1.msra.mxu0 %v532
    %576 = vmatprep.subr.mxu0 %v531
    %577 = vmatpush1.msra.mxu0 %v530
    %578 = vmatprep.subr.mxu0 %v529
    %579 = vmatpush1.msra.mxu0 %v528
    %580 = vmatprep.subr.mxu0 %v527
    %581 = vmatpush1.msra.mxu0 %v526
    %582 = vmatprep.subr.mxu0 %v525
    %583 = vmatpush1.msra.mxu0 %v524
    %584 = vmatprep.subr.mxu0 %v523
    %585 = vmatpush1.msra.mxu0 %v522
    %586 = vmatprep.subr.mxu0 %v521
    %587 = vmatpush1.msra.mxu0 %v520
    %588 = vmatprep.subr.mxu0 %v519
    %589 = vmatpush1.msra.mxu0 %v518
    %590 = vmatprep.subr.mxu0 %v517
    %591 = vmatpush1.msra.mxu0 %v516
    %592 = vmatprep.subr.mxu0 %v515
    %593 = vmatpush1.msra.mxu0 %v514
    %594 = vmatprep.subr.mxu0 %v513
    %595 = vmatpush1.msra.mxu0 %v512
    %596 = vmatprep.subr.mxu0 %v511
    %597 = vmatpush1.msra.mxu0 %v510
    %598 = vmatprep.subr.mxu0 %v509
    %599 = vmatpush1.msra.mxu0 %v508
    %600 = vmatprep.subr.mxu0 %v507
    %601 = vmatpush1.msra.mxu0 %v506
    %602 = vmatprep.subr.mxu0 %v569
    %603 = vmatpush2.msra.mxu0 %v568
    %604 = vmatprep.subr.mxu0 %v567
    %605 = vmatpush2.msra.mxu0 %v566
    %606 = vmatprep.subr.mxu0 %v565
    %607 = vmatpush2.msra.mxu0 %v564
    %608 = vmatprep.subr.mxu0 %v563
    %609 = vmatpush2.msra.mxu0 %v562
    %610 = vmatprep.subr.mxu0 %v561
    %611 = vmatpush2.msra.mxu0 %v560
    %612 = vmatprep.subr.mxu0 %v559
    %613 = vmatpush2.msra.mxu0 %v558
    %614 = vmatprep.subr.mxu0 %v557
    %615 = vmatpush2.msra.mxu0 %v556
    %616 = vmatprep.subr.mxu0 %v555
    %617 = vmatpush2.msra.mxu0 %v554
    %618 = vmatprep.subr.mxu0 %v553
    %619 = vmatpush2.msra.mxu0 %v552
    %620 = vmatprep.subr.mxu0 %v551
    %621 = vmatpush2.msra.mxu0 %v550
    %622 = vmatprep.subr.mxu0 %v549
    %623 = vmatpush2.msra.mxu0 %v548
    %624 = vmatprep.subr.mxu0 %v547
    %625 = vmatpush2.msra.mxu0 %v546
    %626 = vmatprep.subr.mxu0 %v545
    %627 = vmatpush2.msra.mxu0 %v544
    %628 = vmatprep.subr.mxu0 %v543
    %629 = vmatpush2.msra.mxu0 %v542
    %630 = vmatprep.subr.mxu0 %v541
    %631 = vmatpush2.msra.mxu0 %v540
    %632 = vmatprep.subr.mxu0 %v539
    %633 = vmatpush2.msra.mxu0 %v538
    %634 = vmatprep.mubr.f32.mxu0 %v295
    %635 = vmatmul.mubr.f32.gmra.mxu0 %v294
    %v636 = vpop.f32.mrf.mxu0
    %v637 = vadd.f32 0.0, %v636
    %v638 = vpop.f32.mrf.mxu0
    %v639 = vadd.f32 0.0, %v638
    %640 = vmatprep.mubr.f32.mxu0 %v505
    %641 = vmatmul.mubr.f32.gmra.mxu0 %v504
    %v642 = vpop.f32.mrf.mxu0
    %v643 = vadd.f32 0.0, %v642
    %v644 = vpop.f32.mrf.mxu0
    %v645 = vadd.f32 0.0, %v644
    %646 = vdwg.mxu0
    %v647 = vld [vmem:[%s4] sm:$0x1]
    %v648 = vadd.f32 %v647, %v637
    %v651 = vunpack.c.l.s4 1966171168
    %v652 = vunpack.c.0.s8 %v651
    %v653 = vlaneseq
    %v654 = vshrl.u32 %v653, 7
    %v655 = vsub.s32 %v652, %v654
    %v656 = vrot.slane %v637, %v655
    %v657 = vcombine.high %v656, %v656
    %v659 = vunpack.c.l.s4 1966171168
    %v660 = vunpack.c.0.s8 %v659
    %v661 = vlaneseq
    %v662 = vshrl.u32 %v661, 7
    %v663 = vsub.s32 %v660, %v662
    %v664 = vrot.slane %v656, %v663
    %v666 = vunpack.c.l.s4 1966171168
    %v667 = vunpack.c.0.s8 %v666
    %v668 = vlaneseq
    %v669 = vshrl.u32 %v668, 7
    %v670 = vsub.s32 %v667, %v669
    %v671 = vrot.slane %v657, %v670
    %672 = vrot.lane.b32.xlu0 %v671, 96
    %v673 = vpop.permute.xlu0 %672
    %v675 = vadd.f32 %v648, %v673
    %v676 = vcombine.high %v664, %v664
    %677 = vrot.lane.b32.xlu0 %v676, 64
    %v678 = vpop.permute.xlu0 %677
    %v680 = vadd.f32 %v675, %v678
    %v681 = vcombine.high %v671, %v671
    %682 = vrot.lane.b32.xlu0 %v681, 32
    %v683 = vpop.permute.xlu0 %682
    %v685 = vadd.f32 %v680, %v683
    %v687 = vcombine.high %v639, %v639
    %v689 = vunpack.c.l.s4 1966171168
    %v690 = vunpack.c.0.s8 %v689
    %v691 = vlaneseq
    %v692 = vshrl.u32 %v691, 7
    %v693 = vsub.s32 %v690, %v692
    %v694 = vrot.slane %v687, %v693
    %v696 = vunpack.c.l.s4 1966171168
    %v697 = vunpack.c.0.s8 %v696
    %v698 = vlaneseq
    %v699 = vshrl.u32 %v698, 7
    %v700 = vsub.s32 %v697, %v699
    %v701 = vrot.slane %v694, %v700
    %v703 = vadd.f32 %v685, %v701
    %v704 = vcombine.high %v694, %v694
    %v706 = vunpack.c.l.s4 1966171168
    %v707 = vunpack.c.0.s8 %v706
    %v708 = vlaneseq
    %v709 = vshrl.u32 %v708, 7
    %v710 = vsub.s32 %v707, %v709
    %v711 = vrot.slane %v704, %v710
    %712 = vrot.lane.b32.xlu0 %v711, 96
    %v713 = vpop.permute.xlu0 %712
    %v715 = vadd.f32 %v703, %v713
    %v716 = vcombine.high %v701, %v701
    %717 = vrot.lane.b32.xlu0 %v716, 64
    %v718 = vpop.permute.xlu0 %717
    %v720 = vadd.f32 %v715, %v718
    %v721 = vcombine.high %v711, %v711
    %722 = vrot.lane.b32.xlu0 %v721, 32
    %v723 = vpop.permute.xlu0 %722
    %v725 = vadd.f32 %v720, %v723
    %v726 = vadd.f32 %v647, %v643
    %v729 = vunpack.c.l.s4 1966171168
    %v730 = vunpack.c.0.s8 %v729
    %v731 = vlaneseq
    %v732 = vshrl.u32 %v731, 7
    %v733 = vsub.s32 %v730, %v732
    %v734 = vrot.slane %v643, %v733
    %v735 = vcombine.high %v734, %v734
    %v737 = vunpack.c.l.s4 1966171168
    %v738 = vunpack.c.0.s8 %v737
    %v739 = vlaneseq
    %v740 = vshrl.u32 %v739, 7
    %v741 = vsub.s32 %v738, %v740
    %v742 = vrot.slane %v734, %v741
    %v744 = vunpack.c.l.s4 1966171168
    %v745 = vunpack.c.0.s8 %v744
    %v746 = vlaneseq
    %v747 = vshrl.u32 %v746, 7
    %v748 = vsub.s32 %v745, %v747
    %v749 = vrot.slane %v735, %v748
    %750 = vrot.lane.b32.xlu0 %v749, 96
    %v751 = vpop.permute.xlu0 %750
    %v753 = vadd.f32 %v726, %v751
    %v754 = vcombine.high %v742, %v742
    %755 = vrot.lane.b32.xlu0 %v754, 64
    %v756 = vpop.permute.xlu0 %755
    %v758 = vadd.f32 %v753, %v756
    %v759 = vcombine.high %v749, %v749
    %760 = vrot.lane.b32.xlu0 %v759, 32
    %v761 = vpop.permute.xlu0 %760
    %v763 = vadd.f32 %v758, %v761
    %v765 = vcombine.high %v645, %v645
    %v767 = vunpack.c.l.s4 1966171168
    %v768 = vunpack.c.0.s8 %v767
    %v769 = vlaneseq
    %v770 = vshrl.u32 %v769, 7
    %v771 = vsub.s32 %v768, %v770
    %v772 = vrot.slane %v765, %v771
    %v774 = vunpack.c.l.s4 1966171168
    %v775 = vunpack.c.0.s8 %v774
    %v776 = vlaneseq
    %v777 = vshrl.u32 %v776, 7
    %v778 = vsub.s32 %v775, %v777
    %v779 = vrot.slane %v772, %v778
    %v781 = vadd.f32 %v763, %v779
    %v782 = vcombine.high %v772, %v772
    %v784 = vunpack.c.l.s4 1966171168
    %v785 = vunpack.c.0.s8 %v784
    %v786 = vlaneseq
    %v787 = vshrl.u32 %v786, 7
    %v788 = vsub.s32 %v785, %v787
    %v789 = vrot.slane %v782, %v788
    %790 = vrot.lane.b32.xlu0 %v789, 96
    %v791 = vpop.permute.xlu0 %790
    %v793 = vadd.f32 %v781, %v791
    %v794 = vcombine.high %v779, %v779
    %795 = vrot.lane.b32.xlu0 %v794, 64
    %v796 = vpop.permute.xlu0 %795
    %v798 = vadd.f32 %v793, %v796
    %v799 = vcombine.high %v789, %v789
    %800 = vrot.lane.b32.xlu0 %v799, 32
    %v801 = vpop.permute.xlu0 %800
    %v803 = vadd.f32 %v798, %v801
    %v805 = vlaneseq
    %v806 = vshrl.u32 %v805, 7
    %v807 = vsub.s32 0, %v806
    %v808 = vrot.slane %v803, %v807
    %vm810 = vcmask 1040384
    %v811 = vsel %vm810, %v725, %v808
    %vm812 = vcmask 254976
    %813 = vst.msk [vmem:[#allocation5] sm:$0x3] %vm812, %v811
    // Predicated region
    $region26: #{fused_dag_forward.1} parent=1 // pred_check
      _
    $region27: #{fused_dag_forward.1} parent=1 // pred_check_branch
      %815 = sbr.rel (0) target = $region29
    $region28: #{fused_dag_forward.1} parent=1 // pred_region
      %s817 = ssub.s32 32, 32
      %818 = vsyncadd [#allocation4], %s817
      %s820 = sshll.u32 [#allocation5], 4
      %s821 = int_to_ptr.vmem [resolvable:$true] %s820
      %823 = dma.vmem_to_hbm [thread:$0]  %s821, 32, %s5, [#allocation4]
    $region29: #{fused_dag_forward.1} parent=1 // pred_fallthru
      _
    // Predicated region
    $region30: #{fused_dag_forward.1} parent=1 // pred_check
      _
    $region31: #{fused_dag_forward.1} parent=1 // pred_check_branch
      %825 = sbr.rel (0) target = $region33
    $region32: #{fused_dag_forward.1} parent=1 // pred_region
      %826 = dma.done [#allocation4], 32
    $region33: #{fused_dag_forward.1} parent=1 // pred_fallthru
      _
    %827 = vsyncpa [#allocation3], 1
    %828 = vsyncpa [#allocation4], 1

</llo_original>
